<compile_context>
chip_gen: v5e
topology: v5e:2x2
jax: 0.10.0
libtpu: 0.0.40
codegen_flags: <defaults>
</compile_context>

<pallas_src>
import functools

import jax
import jax.numpy as jnp
from jax import lax
from jax.experimental import pallas as pl
from jax.experimental.pallas import tpu as pltpu


def _sse_kernel(x_ref, y_ref, acc_ref, *, rows_per_tile, sub_rows,
                tiles_per_core, valid_rows, need_mask):
    """Accumulate sum((y - x)^2) of one (rows_per_tile, C) tile into a
    resident (1, 8, C) f32 output/accumulator block.

    The tile is consumed in `sub_rows`-row sub-chunks (unrolled fori_loop) so
    the f32 temporaries stay small; rows beyond `valid_rows` (ragged tail /
    fully out-of-bounds tiles) are masked to zero in-kernel."""
    c = pl.program_id(0)          # core-split axis ("parallel")
    i = pl.program_id(1)          # row-tile reduction axis ("arbitrary")

    @pl.when(i == 0)
    def _():
        acc_ref[...] = jnp.zeros_like(acc_ref)

    cols = x_ref.shape[-1]
    n_sub = rows_per_tile // sub_rows
    if need_mask:
        row_base = (c * tiles_per_core + i) * rows_per_tile
    else:
        row_base = 0

    def body(s, acc):
        start = pl.multiple_of(s * sub_rows, sub_rows)
        xs = x_ref[pl.ds(start, sub_rows), :].astype(jnp.float32)
        ys = y_ref[pl.ds(start, sub_rows), :].astype(jnp.float32)
        d = ys - xs
        d2 = d * d
        if need_mask:
            rows = (row_base + start
                    + lax.broadcasted_iota(jnp.int32, (sub_rows, 1), 0))
            d2 = jnp.where(rows < valid_rows, d2, 0.0)
        # Fold into an (8, cols) vreg-shaped partial: the reshape splits the
        # sublane-major axis, so the leading-axis sum is a stack of VPU adds
        # (no per-step cross-lane reduce, no scalar SMEM dependency).
        return acc + jnp.sum(d2.reshape(sub_rows // 8, 8, cols), axis=0)

    acc = lax.fori_loop(0, n_sub, body,
                        jnp.zeros((8, cols), jnp.float32), unroll=True)
    acc_ref[0] += acc
    # Final cross-lane/sublane reduce and the divide-by-N happen once in the
    # wrapper on the tiny (n_cores, 8, C) partial-sum output.


def _choose_tiles(n_rows, n_cols, itemsize):
    """Pick the DMA row tile (large, ~4 MiB of input bytes per operand per
    grid step, <= 8192 rows) and the compute sub-chunk (<= 512 rows)."""
    per_tile_budget = 4 * 1024 * 1024
    tm = per_tile_budget // max(1, n_cols * itemsize)
    tm = max(8, min(8192, (tm // 8) * 8))
    n_pad8 = ((n_rows + 7) // 8) * 8
    tm = min(tm, max(8, n_pad8))
    sub = min(512, tm)
    tm = max(sub, (tm // sub) * sub)   # tm is a multiple of sub, sub of 8
    return tm, sub


def _num_row_splits():
    """2-way batch split only on chips with two TensorCores behind a single
    device (v7x) or a megacore pair (v4/v5p); v5e/v6e have a single TC."""
    try:
        kind = jax.devices()[0].device_kind.lower()
    except Exception:
        return 1
    return 2 if ("v7" in kind or "v4" in kind or "v5p" in kind) else 1


def cosine_loss(x, y):
    """Pallas TPU equivalent of CosineLoss.forward:
    ((y - x) ** 2).sum(dim=1).sum() / x.shape[0]."""
    assert x.shape == y.shape and x.ndim >= 2
    n_batch = x.shape[0]

    # Lane-dense presentation: if the total element count is 128-aligned,
    # view the operands as a (total // 128, 128) slab (free row-major
    # reshape); otherwise flatten trailing dims and use full-extent last dim.
    total = x.size
    if total % 128 == 0:
        r, cdim = total // 128, 128
    else:
        r, cdim = n_batch, total // n_batch
    x2 = x.reshape(r, cdim)
    y2 = y.reshape(r, cdim)

    itemsize = jnp.dtype(x.dtype).itemsize
    tm, sub = _choose_tiles(r, cdim, itemsize)
    tiles_total = pl.cdiv(r, tm)

    n_cores = _num_row_splits()
    if tiles_total < 2 * n_cores:
        n_cores = 1
    t_per_core = pl.cdiv(tiles_total, n_cores)

    covered_rows = n_cores * t_per_core * tm
    need_mask = covered_rows != r          # ragged tail and/or extra tail tile
    clamp_blocks = n_cores * t_per_core > tiles_total

    def in_map(c, i):
        blk = c * t_per_core + i
        if clamp_blocks:
            # Fully out-of-bounds tail tiles (odd tile count on the 2-core
            # split) re-read the last valid block; they are fully masked
            # in-kernel since their absolute row indices are all >= r.
            blk = jnp.minimum(blk, tiles_total - 1)
        return (blk, 0)

    kernel = functools.partial(
        _sse_kernel, rows_per_tile=tm, sub_rows=sub,
        tiles_per_core=t_per_core, valid_rows=r, need_mask=need_mask)

    # Honest VMEM budget: double-buffered input tiles + f32 sub-chunk temps
    # + resident accumulator blocks, with headroom; floored at 32 MiB (v5e's
    # scoped default is 16 MiB), capped under v7x's 64 MiB physical.
    vmem_need = (4 * tm * cdim * itemsize      # 2 inputs x 2 pipeline buffers
                 + 4 * sub * cdim * 4          # f32 d / d2 / mask temporaries
                 + 4 * 8 * cdim * 4)           # accumulator block(s)
    vmem_limit = int(min(64 * 1024 * 1024,
                         max(32 * 1024 * 1024, int(vmem_need * 1.5))))

    partials = pl.pallas_call(
        kernel,
        out_shape=jax.ShapeDtypeStruct((n_cores, 8, cdim), jnp.float32),
        grid_spec=pltpu.PrefetchScalarGridSpec(
            num_scalar_prefetch=0,
            grid=(n_cores, t_per_core),
            in_specs=[
                pl.BlockSpec((tm, cdim), in_map),
                pl.BlockSpec((tm, cdim), in_map),
            ],
            # One resident accumulator block per core-half; block index is
            # constant along the reduction axis -> written back once per half.
            out_specs=pl.BlockSpec((1, 8, cdim), lambda c, i: (c, 0, 0)),
        ),
        compiler_params=pltpu.CompilerParams(
            dimension_semantics=("parallel", "arbitrary"),
            vmem_limit_bytes=vmem_limit,
        ),
    )(x2, y2)

    # Single tiny final reduce + normalization by the ORIGINAL batch size.
    return jnp.sum(partials) / jnp.float32(n_batch)


def cosine_loss_ref(x, y):
    a = (y.astype(jnp.float32) - x.astype(jnp.float32)) ** 2
    lossa = jnp.sum(a, axis=1)
    return jnp.sum(lossa) / x.shape[0]


if __name__ == "__main__":
    key = jax.random.PRNGKey(0)

    # Case 1: lane-aligned, exact tiling (no mask path).
    k1, k2, key = (*jax.random.split(key, 2), key)
    x1 = jax.random.normal(k1, (16, 128), dtype=jnp.float32)
    y1 = jax.random.normal(k2, (16, 128), dtype=jnp.float32)
    out1 = jax.block_until_ready(cosine_loss(x1, y1))
    ref1 = cosine_loss_ref(x1, y1)
    assert jnp.allclose(out1, ref1, rtol=1e-5, atol=1e-5), (out1, ref1)

    # Case 2: ragged, non-128 feature dim (full-extent last dim + row mask).
    k3, k4, key = (*jax.random.split(key, 2), key)
    x2 = jax.random.normal(k3, (10, 48), dtype=jnp.float32)
    y2 = jax.random.normal(k4, (10, 48), dtype=jnp.float32)
    out2 = jax.block_until_ready(cosine_loss(x2, y2))
    ref2 = cosine_loss_ref(x2, y2)
    assert jnp.allclose(out2, ref2, rtol=1e-5, atol=1e-5), (out2, ref2)

    # Case 3: lane-aligned total but ragged flattened row count (mask path),
    # bf16 inputs with f32 accumulation.
    k5, k6, key = (*jax.random.split(key, 2), key)
    x3 = jax.random.normal(k5, (12, 160), dtype=jnp.bfloat16)
    y3 = jax.random.normal(k6, (12, 160), dtype=jnp.bfloat16)
    out3 = jax.block_until_ready(cosine_loss(x3, y3))
    ref3 = cosine_loss_ref(x3, y3)
    assert jnp.allclose(out3, ref3, rtol=1e-2, atol=1e-2), (out3, ref3)

    print("KERNEL_OK")
</pallas_src>

<mosaic_0001>
module attributes {stable_mosaic.version = 11 : i64} {
  func.func @_sse_kernel(%arg0: i32, %arg1: i32, %arg2: memref<16x128xf32, #tpu.memory_space<vmem>>, %arg3: memref<16x128xf32, #tpu.memory_space<vmem>>, %arg4: memref<1x8x128xf32, #tpu.memory_space<vmem>>) attributes {dimension_semantics = [#tpu.dimension_semantics<parallel>, #tpu.dimension_semantics<arbitrary>], iteration_bounds = array<i64: 1, 1>, scalar_prefetch = 0 : i64, scratch_operands = 0 : i64, tpu.core_type = #tpu.core_type<tc>, window_params = [{transform_indices = @transform_0, window_bounds = array<i64: 16, 128>}, {transform_indices = @transform_1, window_bounds = array<i64: 16, 128>}, {transform_indices = @transform_2, window_bounds = array<i64: 1, 8, 128>}]} {
    %c0_i32 = arith.constant 0 : i32
    %0 = arith.cmpi eq, %arg1, %c0_i32 : i32
    %1 = arith.extui %0 : i1 to i32
    %c0_i32_0 = arith.constant 0 : i32
    %2 = arith.cmpi ne, %1, %c0_i32_0 : i32
    scf.if %2 {
      %cst_10 = arith.constant 0.000000e+00 : f32
      %21 = vector.broadcast %cst_10 : f32 to vector<1x8x128xf32>
      %c0_11 = arith.constant 0 : index
      %c0_12 = arith.constant 0 : index
      %c0_13 = arith.constant 0 : index
      %22 = vector.load %arg4[%c0_11, %c0_12, %c0_13] : memref<1x8x128xf32, #tpu.memory_space<vmem>>, vector<1x8x128xf32>
      tpu.vector_store %arg4[%c0_11, %c0_12, %c0_13], %21 {strides = array<i32>} : memref<1x8x128xf32, #tpu.memory_space<vmem>>, vector<1x8x128xf32>,
    } else {
    }
    %cst = arith.constant 0.000000e+00 : f32
    %3 = vector.broadcast %cst : f32 to vector<8x128xf32>
    %c0_i32_1 = arith.constant 0 : i32
    %c16_i32 = arith.constant 16 : i32
    %4 = arith.muli %c0_i32_1, %c16_i32 : i32
    %5 = tpu.assume_multiple %4, 16 : i32
    %6 = arith.index_cast %5 : i32 to index
    %c0 = arith.constant 0 : index
    %7 = vector.load %arg2[%6, %c0] : memref<16x128xf32, #tpu.memory_space<vmem>>, vector<16x128xf32>
    %8 = arith.index_cast %5 : i32 to index
    %c0_2 = arith.constant 0 : index
    %9 = vector.load %arg3[%8, %c0_2] : memref<16x128xf32, #tpu.memory_space<vmem>>, vector<16x128xf32>
    %10 = arith.subf %9, %7 : vector<16x128xf32>
    %11 = arith.mulf %10, %10 : vector<16x128xf32>
    %12 = vector.shape_cast %11 : vector<16x128xf32> to vector<2x8x128xf32>
    %cst_3 = arith.constant dense<0.000000e+00> : vector<8x128xf32>
    %13 = vector.multi_reduction <add>, %12, %cst_3 [0] : vector<2x8x128xf32> to vector<8x128xf32>
    %14 = arith.addf %3, %13 : vector<8x128xf32>
    %c1_i32 = arith.constant 1 : i32
    %c0_4 = arith.constant 0 : index
    %c0_5 = arith.constant 0 : index
    %c0_6 = arith.constant 0 : index
    %15 = vector.load %arg4[%c0_4, %c0_5, %c0_6] : memref<1x8x128xf32, #tpu.memory_space<vmem>>, vector<1x8x128xf32>
    %16 = vector.shape_cast %15 : vector<1x8x128xf32> to vector<8x128xf32>
    %17 = arith.addf %16, %14 : vector<8x128xf32>
    %c0_7 = arith.constant 0 : index
    %c0_8 = arith.constant 0 : index
    %c0_9 = arith.constant 0 : index
    %18 = vector.load %arg4[%c0_7, %c0_8, %c0_9] : memref<1x8x128xf32, #tpu.memory_space<vmem>>, vector<1x8x128xf32>
    %19 = vector.shape_cast %18 : vector<1x8x128xf32> to vector<8x128xf32>
    %20 = vector.shape_cast %17 : vector<8x128xf32> to vector<1x8x128xf32>
    tpu.vector_store %arg4[%c0_7, %c0_8, %c0_9], %20 {strides = array<i32>} : memref<1x8x128xf32, #tpu.memory_space<vmem>>, vector<1x8x128xf32>,
    return
  }
  func.func @transform_0(%arg0: i32, %arg1: i32) -> (i32, i32) {
    %c1_i32 = arith.constant 1 : i32
    %0 = arith.muli %arg0, %c1_i32 : i32
    %1 = arith.addi %0, %arg1 : i32
    %c0_i32 = arith.constant 0 : i32
    %c0_i32_0 = arith.constant 0 : i32
    return %1, %c0_i32 : i32, i32
  }
  func.func @transform_1(%arg0: i32, %arg1: i32) -> (i32, i32) {
    %c1_i32 = arith.constant 1 : i32
    %0 = arith.muli %arg0, %c1_i32 : i32
    %1 = arith.addi %0, %arg1 : i32
    %c0_i32 = arith.constant 0 : i32
    %c0_i32_0 = arith.constant 0 : i32
    return %1, %c0_i32 : i32, i32
  }
  func.func @transform_2(%arg0: i32, %arg1: i32) -> (i32, i32, i32) {
    %c0_i32 = arith.constant 0 : i32
    %c0_i32_0 = arith.constant 0 : i32
    %c0_i32_1 = arith.constant 0 : i32
    return %arg0, %c0_i32, %c0_i32_0 : i32, i32, i32
  }
}

</mosaic_0001>

<llo_original>
// kernel: tpu_custom_call.1
$region0: #{tpu_custom_call.1}
  #allocation0 [shape = 'u32[]', space=smem, size = 0x4, offset = 0x4, fixed_abs, tag = 'smem constant byte address 0x4 - core index']
  #allocation1 [shape = 'u32[72,128]{1,0:T(1,128)}', space=vmem, size = 0x9000, scoped, tag = 'internal scratch']
  %s0 = inlined_call_operand.hbm [shape: f32[16,128], index: 0, kind: input, shape index: {}]
  %s1 = inlined_call_operand.hbm [shape: f32[16,128], index: 1, kind: input, shape index: {}]
  %s2 = inlined_call_operand.hbm [shape: f32[1,8,128], index: 2, kind: output, shape index: {}]
  %s3 = sld [smem:[#allocation0]]
  $region30: #{tpu_custom_call.1} parent=0
    _
  %s5 = ssub.s32 1, %s3
  %s6 = scalar_select 0, %s5, %s3
  $region1: #{tpu_custom_call.1} parent=0
    #allocation2 [shape = 'u8[8192]{0}', space=vmem, size = 0x2000, scoped, tag = 'input window, operand 0, single buffered']
    #allocation3 [shape = 's32[1]{0}', space=sflag, size = 0x4, scoped, tag = 'scoped memory for tpu_custom_call.1']
    #allocation4 [shape = 's32[1]{0}', space=sflag, size = 0x4, scoped, tag = 'scoped memory for tpu_custom_call.1']
    #allocation5 [shape = 'u8[8192]{0}', space=vmem, size = 0x2000, scoped, tag = 'input window, operand 1, single buffered']
    #allocation6 [shape = 's32[1]{0}', space=sflag, size = 0x4, scoped, tag = 'scoped memory for tpu_custom_call.1']
    #allocation7 [shape = 'u8[4096]{0}', space=vmem, size = 0x1000, scoped, tag = 'output window, operand 0, single buffered']
    %7 = vsyncpa [#allocation3], 0
    %8 = vsyncpa [#allocation6], 0
    %9 = vsyncpa [#allocation4], 0
    // Predicated region
    $region2: #{tpu_custom_call.1} parent=1 // pred_check
      _
    $region3: #{tpu_custom_call.1} parent=1 // pred_check_branch
      %11 = sbr.rel (0) target = $region5
    $region4: #{tpu_custom_call.1} parent=1 // pred_region
      %s12 = sadd.s32 0, 0
      %s13 = smul.u32 2, %s12
      %15 = vsyncadd [#allocation3], 0
      %s16 = smul.addr %s13, 8
      %s17 = scalar_lea.hbm %s0, %s16
      %s18 = sshll.u32 %s17, 4
      %s19 = int_to_ptr.hbm [resolvable:$true] %s18
      %s20 = sshll.u32 [#allocation2], 4
      %s21 = int_to_ptr.vmem [resolvable:$true] %s20
      %26 = dma.hbm_to_vmem [thread:$0]  %s19, 256, %s21, [#allocation3], 128, 128, 8
    $region5: #{tpu_custom_call.1} parent=1 // pred_fallthru
      _
    // Predicated region
    $region6: #{tpu_custom_call.1} parent=1 // pred_check
      _
    $region7: #{tpu_custom_call.1} parent=1 // pred_check_branch
      %28 = sbr.rel (0) target = $region9
    $region8: #{tpu_custom_call.1} parent=1 // pred_region
      %s29 = sadd.s32 0, 0
      %s30 = smul.u32 2, %s29
      %32 = vsyncadd [#allocation6], 0
      %s33 = smul.addr %s30, 8
      %s34 = scalar_lea.hbm %s1, %s33
      %s35 = sshll.u32 %s34, 4
      %s36 = int_to_ptr.hbm [resolvable:$true] %s35
      %s37 = sshll.u32 [#allocation5], 4
      %s38 = int_to_ptr.vmem [resolvable:$true] %s37
      %43 = dma.hbm_to_vmem [thread:$0]  %s36, 256, %s38, [#allocation6], 128, 128, 8
    $region9: #{tpu_custom_call.1} parent=1 // pred_fallthru
      _
    // Predicated region
    $region10: #{tpu_custom_call.1} parent=1 // pred_check
      _
    $region11: #{tpu_custom_call.1} parent=1 // pred_check_branch
      %45 = sbr.rel (0) target = $region13
    $region12: #{tpu_custom_call.1} parent=1 // pred_region
      %47 = dma.done [#allocation3], 256
    $region13: #{tpu_custom_call.1} parent=1 // pred_fallthru
      _
    // Predicated region
    $region14: #{tpu_custom_call.1} parent=1 // pred_check
      _
    $region15: #{tpu_custom_call.1} parent=1 // pred_check_branch
      %49 = sbr.rel (0) target = $region17
    $region16: #{tpu_custom_call.1} parent=1 // pred_region
      %51 = dma.done [#allocation6], 256
    $region17: #{tpu_custom_call.1} parent=1 // pred_fallthru
      _
    %s52 = sadd.s32 0, 0
    %s53 = smul.u32 2, %s52
    %s54 = sadd.s32 0, 0
    %s55 = smul.u32 2, %s54
    %p56 = scmp.eq.s32.totalorder 0, 0
    // Predicated region
    $region18: #{tpu_custom_call.1} parent=1 // pred_check
      %p57 = pneg %p56
    $region19: #{tpu_custom_call.1} parent=1 // pred_check_branch
      %59 = sbr.rel (%p57) target = $region21
    $region20: #{tpu_custom_call.1} parent=1 // pred_region
      %60 = vst [vmem:[#allocation7] sm:$0xff] 0.0
    $region21: #{tpu_custom_call.1} parent=1 // pred_fallthru
      _
    %v61 = vld [vmem:[#allocation2] sm:$0xff]
    %v62 = vld [vmem:[#allocation2 + $0x8] sm:$0xff]
    %v63 = vld [vmem:[#allocation5] sm:$0xff]
    %v64 = vld [vmem:[#allocation5 + $0x8] sm:$0xff]
    %v65 = vsub.f32 %v63, %v61
    %v66 = vsub.f32 %v64, %v62
    %v67 = vmul.f32 %v65, %v65
    %v68 = vmul.f32 %v66, %v66
    %v69 = vadd.f32 %v67, %v68
    %v70 = vadd.f32 %v69, 0.0
    %v71 = vld [vmem:[#allocation7] sm:$0xff]
    %v72 = vadd.f32 %v71, %v70
    %73 = vst [vmem:[#allocation7] sm:$0xff] %v72
    // Predicated region
    $region22: #{tpu_custom_call.1} parent=1 // pred_check
      _
    $region23: #{tpu_custom_call.1} parent=1 // pred_check_branch
      %75 = sbr.rel (0) target = $region25
    $region24: #{tpu_custom_call.1} parent=1 // pred_region
      %77 = vsyncadd [#allocation4], 0
      %s79 = sshll.u32 [#allocation7], 4
      %s80 = int_to_ptr.vmem [resolvable:$true] %s79
      %s81 = sshll.u32 %s2, 4
      %s82 = int_to_ptr.hbm [resolvable:$true] %s81
      %84 = dma.vmem_to_hbm [thread:$0]  %s80, 128, %s82, [#allocation4]
    $region25: #{tpu_custom_call.1} parent=1 // pred_fallthru
      _
    // Predicated region
    $region26: #{tpu_custom_call.1} parent=1 // pred_check
      _
    $region27: #{tpu_custom_call.1} parent=1 // pred_check_branch
      %86 = sbr.rel (0) target = $region29
    $region28: #{tpu_custom_call.1} parent=1 // pred_region
      %88 = dma.done [#allocation4], 128
    $region29: #{tpu_custom_call.1} parent=1 // pred_fallthru
      _
    %89 = vsyncpa [#allocation3], 1
    %90 = vsyncpa [#allocation6], 1
    %91 = vsyncpa [#allocation4], 1

</llo_original>
